<compile_context>
chip_gen: v5e
topology: v5e:2x2
jax: 0.10.0
libtpu: 0.0.40
codegen_flags: <defaults>
</compile_context>

<pallas_src>
import jax
import jax.numpy as jnp
from jax.experimental import pallas as pl
from jax.experimental.pallas import tpu as pltpu

# Model hyperparameters (small, deterministic, consistent with the module).
n_class = 32    # vocabulary size
n_step = 4      # context length
m = 8           # embedding dim
n_hidden = 16   # hidden dim
batch = 8       # batch size

# Lane-dense padded widths (multiples of 128 so slices/stores are unmasked).
H_PAD = 128                     # padded n_hidden
C_PAD = 128                     # padded n_class
K_FUSED = n_step * n_class      # 128: contraction depth of the fused one-hot matmul

_HIGHEST = jax.lax.Precision.HIGHEST


def nnlm_kernel(idx_ref, chw_ref, ut_ref, d_ref, b_ref, o_ref):
    """Fused NNLM forward for one batch tile.

    idx_ref : (TB, n_step) int32 token ids
    chw_ref : (n_step*n_class, H_PAD+C_PAD) precomputed C @ [Ht|Wt] per context step
    ut_ref  : (H_PAD, C_PAD) padded U.weight.T
    d_ref   : (1, H_PAD)  padded hidden bias
    b_ref   : (1, C_PAD)  padded output bias
    o_ref   : (TB, C_PAD) padded logits (wrapper optionally slices to n_class)
    """
    idx = idx_ref[...]                                            # (TB, n_step) int32
    tb = idx.shape[0]

    # Single (TB, 128) one-hot covering all n_step positions: lane s*n_class + idx[:, s]
    # is 1.  Each step can only hit its own 32-lane block, so the OR is an exact one-hot.
    lane = jax.lax.broadcasted_iota(jnp.int32, (tb, K_FUSED), 1)  # full 128-lane iota
    hit = lane == idx[:, 0:1]
    for s in range(1, n_step):
        hit = jnp.logical_or(hit, lane == idx[:, s:s + 1] + s * n_class)
    onehot = hit.astype(jnp.float32)                              # (TB, 128)

    # One K=128 MXU matmul does embedding lookup + x@Ht + x@Wt simultaneously.
    acc = jnp.dot(onehot, chw_ref[...],
                  preferred_element_type=jnp.float32,
                  precision=_HIGHEST)                             # (TB, H_PAD + C_PAD)

    # Lane-tile-aligned split of the fused result.
    hidden = jnp.tanh(d_ref[...] + acc[:, :H_PAD])                # (TB, H_PAD)
    logits = (b_ref[...] + acc[:, H_PAD:]
              + jnp.dot(hidden, ut_ref[...],
                        preferred_element_type=jnp.float32,
                        precision=_HIGHEST))                      # (TB, C_PAD)
    o_ref[...] = logits.astype(o_ref.dtype)                       # unmasked 128-lane vst


def _pick_batch_tile(B):
    """Prefer >=2 sublane-aligned grid steps (engages both v7x TensorCores) when the
    batch allows it; cap the tile at 512 rows so the (TB,256) matmul output and the
    double-buffered logits tile stay small in vregs/VMEM on every generation."""
    if B >= 16 and B % 16 == 0:
        tile = min(B // 2, 512)
        while B % tile:
            tile -= 8
        return tile
    return B


def nnlm_forward(x_idx, params, return_padded=False):
    """x_idx: (B, n_step) int32 token ids -> (B, n_class) logits
    (or (B, C_PAD) zero-padded logits if return_padded=True)."""
    C, Ht, Wt, Ut, d, b = (
        params["C"], params["Ht"], params["Wt"], params["Ut"],
        params["d"], params["b"],
    )
    B = x_idx.shape[0]
    nm = n_step * m
    W_FUSED = H_PAD + C_PAD

    # Zero-pad weights/biases to lane-dense (128-wide) slabs; zeros keep math exact.
    Ht_p = jnp.zeros((nm, H_PAD), jnp.float32).at[:, :n_hidden].set(Ht)
    Wt_p = jnp.zeros((nm, C_PAD), jnp.float32).at[:, :n_class].set(Wt)
    HWt = jnp.concatenate([Ht_p, Wt_p], axis=1)                   # (nm, 256)

    # Parameter-only fusion of embedding + [Ht|Wt]:
    #   CHW[s*n_class + v, :] = sum_k C[v, k] * HWt[s*m + k, :]
    CHW = jnp.einsum("vk,skw->svw", C, HWt.reshape(n_step, m, W_FUSED),
                     precision=_HIGHEST).reshape(K_FUSED, W_FUSED)  # (128, 256)

    Ut_p = jnp.zeros((H_PAD, C_PAD), jnp.float32).at[:n_hidden, :n_class].set(Ut)
    d_p = jnp.zeros((1, H_PAD), jnp.float32).at[:, :n_hidden].set(d.reshape(1, -1))
    b_p = jnp.zeros((1, C_PAD), jnp.float32).at[:, :n_class].set(b.reshape(1, -1))

    B_TILE = _pick_batch_tile(B)
    assert B % B_TILE == 0, "batch must be a multiple of the batch tile"
    grid = (B // B_TILE,)

    cost = pl.CostEstimate(
        flops=2 * B * (K_FUSED * W_FUSED            # fused one-hot @ CHW
                       + H_PAD * C_PAD),            # hidden @ Ut
        transcendentals=B * H_PAD,                  # tanh over padded hidden lanes
        bytes_accessed=4 * (x_idx.size + CHW.size + Ut_p.size
                            + d_p.size + b_p.size + B * C_PAD),
    )

    out_padded = pl.pallas_call(
        nnlm_kernel,
        out_shape=jax.ShapeDtypeStruct((B, C_PAD), jnp.float32),
        grid=grid,
        in_specs=[
            pl.BlockSpec((B_TILE, n_step), lambda i: (i, 0)),      # token ids (per tile)
            pl.BlockSpec((K_FUSED, W_FUSED), lambda i: (0, 0)),    # CHW (VMEM-resident)
            pl.BlockSpec((H_PAD, C_PAD), lambda i: (0, 0)),        # Ut
            pl.BlockSpec((1, H_PAD), lambda i: (0, 0)),            # d
            pl.BlockSpec((1, C_PAD), lambda i: (0, 0)),            # b
        ],
        out_specs=pl.BlockSpec((B_TILE, C_PAD), lambda i: (i, 0)),
        compiler_params=pltpu.CompilerParams(
            dimension_semantics=("parallel",)),
        cost_estimate=cost,
    )(x_idx.astype(jnp.int32), CHW, Ut_p, d_p, b_p)

    if return_padded:
        return out_padded        # lanes >= n_class are exact zeros (mask before softmax)
    return out_padded[:, :n_class]


def init_params(key):
    kC, kH, kW, kU = jax.random.split(key, 4)
    return {
        # nn.Embedding(n_class, m)
        "C": jax.random.normal(kC, (n_class, m), jnp.float32),
        # Linear layers stored pre-transposed as (in, out) = weight.T
        "Ht": jax.random.normal(kH, (n_step * m, n_hidden), jnp.float32) * 0.1,
        "Wt": jax.random.normal(kW, (n_step * m, n_class), jnp.float32) * 0.1,
        "Ut": jax.random.normal(kU, (n_hidden, n_class), jnp.float32) * 0.1,
        # nn.Parameter(torch.ones(...))
        "d": jnp.ones((n_hidden,), jnp.float32),
        "b": jnp.ones((n_class,), jnp.float32),
    }


def reference_forward(x_idx, params):
    """Pure-JAX f32 reference matching the PyTorch forward exactly."""
    x = jnp.take(params["C"], x_idx, axis=0).reshape(x_idx.shape[0], n_step * m)
    tanh = jnp.tanh(params["d"] + jnp.dot(x, params["Ht"], precision=_HIGHEST))
    return (params["b"] + jnp.dot(x, params["Wt"], precision=_HIGHEST)
            + jnp.dot(tanh, params["Ut"], precision=_HIGHEST))


if __name__ == "__main__":
    key = jax.random.PRNGKey(0)
    kp, kx = jax.random.split(key)
    params = init_params(kp)
    x_idx = jax.random.randint(kx, (batch, n_step), 0, n_class, dtype=jnp.int32)

    fwd = jax.jit(nnlm_forward)
    out = fwd(x_idx, params)
    out = jax.block_until_ready(out)

    ref = reference_forward(x_idx, params)
    assert out.shape == (batch, n_class)
    assert jnp.allclose(out, ref, atol=1e-4, rtol=1e-4), "mismatch vs reference"
    print("KERNEL_OK")
</pallas_src>

<mosaic_0001>
module attributes {stable_mosaic.version = 11 : i64} {
  func.func @nnlm_kernel(%arg0: i32, %arg1: memref<8x4xi32, #tpu.memory_space<vmem>>, %arg2: memref<128x256xf32, #tpu.memory_space<vmem>>, %arg3: memref<128x128xf32, #tpu.memory_space<vmem>>, %arg4: memref<1x128xf32, #tpu.memory_space<vmem>>, %arg5: memref<1x128xf32, #tpu.memory_space<vmem>>, %arg6: memref<8x128xf32, #tpu.memory_space<vmem>>) attributes {dimension_semantics = [#tpu.dimension_semantics<parallel>], iteration_bounds = array<i64: 1>, scalar_prefetch = 0 : i64, scratch_operands = 0 : i64, tpu.core_type = #tpu.core_type<tc>, window_params = [{transform_indices = @transform_0, window_bounds = array<i64: 8, 4>}, {pipeline_mode = #tpu.pipeline_mode<synchronous>, transform_indices = @transform_1, window_bounds = array<i64: 128, 256>}, {pipeline_mode = #tpu.pipeline_mode<synchronous>, transform_indices = @transform_2, window_bounds = array<i64: 128, 128>}, {pipeline_mode = #tpu.pipeline_mode<synchronous>, transform_indices = @transform_3, window_bounds = array<i64: 1, 128>}, {pipeline_mode = #tpu.pipeline_mode<synchronous>, transform_indices = @transform_4, window_bounds = array<i64: 1, 128>}, {transform_indices = @transform_5, window_bounds = array<i64: 8, 128>}]} {
    %c0 = arith.constant 0 : index
    %c0_0 = arith.constant 0 : index
    %0 = vector.load %arg1[%c0, %c0_0] : memref<8x4xi32, #tpu.memory_space<vmem>>, vector<8x4xi32>
    %1 = tpu.iota {dimensions = array<i32: 1>} : vector<8x128xi32>
    %2 = vector.extract_strided_slice %0 {offsets = [0, 0], sizes = [8, 1], strides = [1, 1]} : vector<8x4xi32> to vector<8x1xi32>
    %3 = vector.broadcast %2 : vector<8x1xi32> to vector<8x128xi32>
    %4 = arith.cmpi eq, %1, %3 : vector<8x128xi32>
    %5 = vector.extract_strided_slice %0 {offsets = [0, 1], sizes = [8, 1], strides = [1, 1]} : vector<8x4xi32> to vector<8x1xi32>
    %c32_i32 = arith.constant 32 : i32
    %6 = vector.broadcast %c32_i32 : i32 to vector<8x1xi32>
    %7 = arith.addi %5, %6 : vector<8x1xi32>
    %8 = vector.broadcast %7 : vector<8x1xi32> to vector<8x128xi32>
    %9 = arith.cmpi eq, %1, %8 : vector<8x128xi32>
    %10 = arith.ori %4, %9 : vector<8x128xi1>
    %11 = vector.extract_strided_slice %0 {offsets = [0, 2], sizes = [8, 1], strides = [1, 1]} : vector<8x4xi32> to vector<8x1xi32>
    %c64_i32 = arith.constant 64 : i32
    %12 = vector.broadcast %c64_i32 : i32 to vector<8x1xi32>
    %13 = arith.addi %11, %12 : vector<8x1xi32>
    %14 = vector.broadcast %13 : vector<8x1xi32> to vector<8x128xi32>
    %15 = arith.cmpi eq, %1, %14 : vector<8x128xi32>
    %16 = arith.ori %10, %15 : vector<8x128xi1>
    %17 = vector.extract_strided_slice %0 {offsets = [0, 3], sizes = [8, 1], strides = [1, 1]} : vector<8x4xi32> to vector<8x1xi32>
    %c96_i32 = arith.constant 96 : i32
    %18 = vector.broadcast %c96_i32 : i32 to vector<8x1xi32>
    %19 = arith.addi %17, %18 : vector<8x1xi32>
    %20 = vector.broadcast %19 : vector<8x1xi32> to vector<8x128xi32>
    %21 = arith.cmpi eq, %1, %20 : vector<8x128xi32>
    %22 = arith.ori %16, %21 : vector<8x128xi1>
    %23 = arith.extui %22 : vector<8x128xi1> to vector<8x128xi32>
    %24 = arith.sitofp %23 : vector<8x128xi32> to vector<8x128xf32>
    %c0_1 = arith.constant 0 : index
    %c0_2 = arith.constant 0 : index
    %25 = vector.load %arg2[%c0_1, %c0_2] : memref<128x256xf32, #tpu.memory_space<vmem>>, vector<128x256xf32>
    %cst = arith.constant dense<0.000000e+00> : vector<8x256xf32>
    %26 = tpu.matmul %24, %25, %cst {dimension_numbers = #tpu.dot_dimension_numbers<[1], [0], [0], [1], [0, 0, 1, 1], [], []>, precision = #tpu.contract_precision<fp32>} : vector<8x128xf32>, vector<128x256xf32>, vector<8x256xf32> -> vector<8x256xf32>
    %c0_3 = arith.constant 0 : index
    %c0_4 = arith.constant 0 : index
    %27 = vector.load %arg4[%c0_3, %c0_4] : memref<1x128xf32, #tpu.memory_space<vmem>>, vector<1x128xf32>
    %28 = vector.extract_strided_slice %26 {offsets = [0, 0], sizes = [8, 128], strides = [1, 1]} : vector<8x256xf32> to vector<8x128xf32>
    %29 = vector.broadcast %27 : vector<1x128xf32> to vector<8x128xf32>
    %30 = arith.addf %29, %28 : vector<8x128xf32>
    %31 = math.tanh %30 : vector<8x128xf32>
    %c0_5 = arith.constant 0 : index
    %c0_6 = arith.constant 0 : index
    %32 = vector.load %arg5[%c0_5, %c0_6] : memref<1x128xf32, #tpu.memory_space<vmem>>, vector<1x128xf32>
    %33 = vector.extract_strided_slice %26 {offsets = [0, 128], sizes = [8, 128], strides = [1, 1]} : vector<8x256xf32> to vector<8x128xf32>
    %34 = vector.broadcast %32 : vector<1x128xf32> to vector<8x128xf32>
    %35 = arith.addf %34, %33 : vector<8x128xf32>
    %c0_7 = arith.constant 0 : index
    %c0_8 = arith.constant 0 : index
    %36 = vector.load %arg3[%c0_7, %c0_8] : memref<128x128xf32, #tpu.memory_space<vmem>>, vector<128x128xf32>
    %cst_9 = arith.constant dense<0.000000e+00> : vector<8x128xf32>
    %37 = tpu.matmul %31, %36, %cst_9 {dimension_numbers = #tpu.dot_dimension_numbers<[1], [0], [0], [1], [0, 0, 1, 1], [], []>, precision = #tpu.contract_precision<fp32>} : vector<8x128xf32>, vector<128x128xf32>, vector<8x128xf32> -> vector<8x128xf32>
    %38 = arith.addf %35, %37 : vector<8x128xf32>
    %c0_10 = arith.constant 0 : index
    %c0_11 = arith.constant 0 : index
    %39 = vector.load %arg6[%c0_10, %c0_11] : memref<8x128xf32, #tpu.memory_space<vmem>>, vector<8x128xf32>
    tpu.vector_store %arg6[%c0_10, %c0_11], %38 {strides = array<i32>} : memref<8x128xf32, #tpu.memory_space<vmem>>, vector<8x128xf32>,
    return
  }
  func.func @transform_0(%arg0: i32) -> (i32, i32) {
    %c0_i32 = arith.constant 0 : i32
    %c0_i32_0 = arith.constant 0 : i32
    return %arg0, %c0_i32 : i32, i32
  }
  func.func @transform_1(%arg0: i32) -> (i32, i32) {
    %c0_i32 = arith.constant 0 : i32
    %c0_i32_0 = arith.constant 0 : i32
    %c0_i32_1 = arith.constant 0 : i32
    return %c0_i32, %c0_i32_0 : i32, i32
  }
  func.func @transform_2(%arg0: i32) -> (i32, i32) {
    %c0_i32 = arith.constant 0 : i32
    %c0_i32_0 = arith.constant 0 : i32
    %c0_i32_1 = arith.constant 0 : i32
    return %c0_i32, %c0_i32_0 : i32, i32
  }
  func.func @transform_3(%arg0: i32) -> (i32, i32) {
    %c0_i32 = arith.constant 0 : i32
    %c0_i32_0 = arith.constant 0 : i32
    %c0_i32_1 = arith.constant 0 : i32
    return %c0_i32, %c0_i32_0 : i32, i32
  }
  func.func @transform_4(%arg0: i32) -> (i32, i32) {
    %c0_i32 = arith.constant 0 : i32
    %c0_i32_0 = arith.constant 0 : i32
    %c0_i32_1 = arith.constant 0 : i32
    return %c0_i32, %c0_i32_0 : i32, i32
  }
  func.func @transform_5(%arg0: i32) -> (i32, i32) {
    %c0_i32 = arith.constant 0 : i32
    %c0_i32_0 = arith.constant 0 : i32
    return %arg0, %c0_i32 : i32, i32
  }
}

</mosaic_0001>

<llo_original>
// kernel: nnlm_forward.1
$region0: #{nnlm_forward.1}
  #allocation0 [shape = 'u32[]', space=smem, size = 0x4, offset = 0x4, fixed_abs, tag = 'smem constant byte address 0x4 - core index']
  #allocation1 [shape = 'u32[72,128]{1,0:T(1,128)}', space=vmem, size = 0x9000, scoped, tag = 'internal scratch']
  %s0 = inlined_call_operand.vmem [shape: s32[8,4], index: 0, kind: input, shape index: {}]
  %s1 = inlined_call_operand.vmem [shape: f32[128,256], index: 1, kind: input, shape index: {}]
  %s2 = inlined_call_operand.vmem [shape: f32[128,128], index: 2, kind: input, shape index: {}]
  %s3 = inlined_call_operand.vmem [shape: f32[1,128], index: 3, kind: input, shape index: {}]
  %s4 = inlined_call_operand.vmem [shape: f32[1,128], index: 4, kind: input, shape index: {}]
  %s5 = inlined_call_operand.hbm [shape: f32[8,128], index: 5, kind: output, shape index: {}]
  %s6 = sld [smem:[#allocation0]]
  $region30: #{nnlm_forward.1} parent=0
    _
  %s8 = ssub.s32 1, %s6
  %s9 = scalar_select 0, %s8, %s6
  $region1: #{nnlm_forward.1} parent=0
    #allocation2 [shape = 'u8[4096]{0}', space=vmem, size = 0x1000, scoped, tag = 'output window, operand 0, single buffered']
    #allocation3 [shape = 's32[1]{0}', space=sflag, size = 0x4, scoped, tag = 'scoped memory for nnlm_forward.1']
    %10 = vsyncpa [#allocation3], 0
    // Predicated region
    $region2: #{nnlm_forward.1} parent=1 // pred_check
      _
    $region3: #{nnlm_forward.1} parent=1 // pred_check_branch
      %12 = sbr.rel (0) target = $region5
    $region4: #{nnlm_forward.1} parent=1 // pred_region
      _
    $region5: #{nnlm_forward.1} parent=1 // pred_fallthru
      _
    // Predicated region
    $region6: #{nnlm_forward.1} parent=1 // pred_check
      _
    $region7: #{nnlm_forward.1} parent=1 // pred_check_branch
      %14 = sbr.rel (0) target = $region9
    $region8: #{nnlm_forward.1} parent=1 // pred_region
      _
    $region9: #{nnlm_forward.1} parent=1 // pred_fallthru
      _
    // Predicated region
    $region10: #{nnlm_forward.1} parent=1 // pred_check
      _
    $region11: #{nnlm_forward.1} parent=1 // pred_check_branch
      %16 = sbr.rel (0) target = $region13
    $region12: #{nnlm_forward.1} parent=1 // pred_region
      _
    $region13: #{nnlm_forward.1} parent=1 // pred_fallthru
      _
    // Predicated region
    $region14: #{nnlm_forward.1} parent=1 // pred_check
      _
    $region15: #{nnlm_forward.1} parent=1 // pred_check_branch
      %18 = sbr.rel (0) target = $region17
    $region16: #{nnlm_forward.1} parent=1 // pred_region
      _
    $region17: #{nnlm_forward.1} parent=1 // pred_fallthru
      _
    // Predicated region
    $region18: #{nnlm_forward.1} parent=1 // pred_check
      _
    $region19: #{nnlm_forward.1} parent=1 // pred_check_branch
      %20 = sbr.rel (0) target = $region21
    $region20: #{nnlm_forward.1} parent=1 // pred_region
      _
    $region21: #{nnlm_forward.1} parent=1 // pred_fallthru
      _
    %v21 = vld [vmem:[%s0] sm:$0xff]
    %v22 = vlaneseq
    %v23 = vand.u32 %v22, 127
    %24 = vset.pattern.permute.xlu0 0
    %25 = vperm.xlu0 %24, %v21
    %v26 = vpop.permute.xlu0 %25
    %vm27 = vcmp.eq.s32.totalorder %v23, %v26
    %v28 = vadd.s32 %v21, 32
    %29 = vset.pattern.permute.xlu0 1
    %30 = vperm.xlu0 %29, %v28
    %v31 = vpop.permute.xlu0 %30
    %vm32 = vcmp.eq.s32.totalorder %v23, %v31
    %vm33 = vmor %vm27, %vm32
    %v34 = vadd.s32 %v21, 64
    %35 = vset.pattern.permute.xlu0 2
    %36 = vperm.xlu0 %35, %v34
    %v37 = vpop.permute.xlu0 %36
    %vm38 = vcmp.eq.s32.totalorder %v23, %v37
    %vm39 = vmor %vm33, %vm38
    %v40 = vadd.s32 %v21, 96
    %41 = vset.pattern.permute.xlu0 3
    %42 = vperm.xlu0 %41, %v40
    %v43 = vpop.permute.xlu0 %42
    %vm44 = vcmp.eq.s32.totalorder %v23, %v43
    %vm45 = vmor %vm39, %vm44
    %v46 = vsel %vm45, 1, 0
    %v47 = vcvt.s32.f32 %v46
    %v48 = vld [vmem:[%s1] sm:$0xff]
    %v49 = vld [vmem:[%s1 + $0x8] sm:$0xff]
    %v50 = vld [vmem:[%s1 + $0x10] sm:$0xff]
    %v51 = vld [vmem:[%s1 + $0x18] sm:$0xff]
    %v52 = vld [vmem:[%s1 + $0x20] sm:$0xff]
    %v53 = vld [vmem:[%s1 + $0x28] sm:$0xff]
    %v54 = vld [vmem:[%s1 + $0x30] sm:$0xff]
    %v55 = vld [vmem:[%s1 + $0x38] sm:$0xff]
    %v56 = vld [vmem:[%s1 + $0x40] sm:$0xff]
    %v57 = vld [vmem:[%s1 + $0x48] sm:$0xff]
    %v58 = vld [vmem:[%s1 + $0x50] sm:$0xff]
    %v59 = vld [vmem:[%s1 + $0x58] sm:$0xff]
    %v60 = vld [vmem:[%s1 + $0x60] sm:$0xff]
    %v61 = vld [vmem:[%s1 + $0x68] sm:$0xff]
    %v62 = vld [vmem:[%s1 + $0x70] sm:$0xff]
    %v63 = vld [vmem:[%s1 + $0x78] sm:$0xff]
    %v64 = vld [vmem:[%s1 + $0x80] sm:$0xff]
    %v65 = vld [vmem:[%s1 + $0x88] sm:$0xff]
    %v66 = vld [vmem:[%s1 + $0x90] sm:$0xff]
    %v67 = vld [vmem:[%s1 + $0x98] sm:$0xff]
    %v68 = vld [vmem:[%s1 + $0xa0] sm:$0xff]
    %v69 = vld [vmem:[%s1 + $0xa8] sm:$0xff]
    %v70 = vld [vmem:[%s1 + $0xb0] sm:$0xff]
    %v71 = vld [vmem:[%s1 + $0xb8] sm:$0xff]
    %v72 = vld [vmem:[%s1 + $0xc0] sm:$0xff]
    %v73 = vld [vmem:[%s1 + $0xc8] sm:$0xff]
    %v74 = vld [vmem:[%s1 + $0xd0] sm:$0xff]
    %v75 = vld [vmem:[%s1 + $0xd8] sm:$0xff]
    %v76 = vld [vmem:[%s1 + $0xe0] sm:$0xff]
    %v77 = vld [vmem:[%s1 + $0xe8] sm:$0xff]
    %v78 = vld [vmem:[%s1 + $0xf0] sm:$0xff]
    %v79 = vld [vmem:[%s1 + $0xf8] sm:$0xff]
    %v80 = vand.u32 %v78, 4294901760
    %81 = vmatpush.msra.mxu0 %v80
    %v82 = vand.u32 %v76, 4294901760
    %83 = vmatpush.msra.mxu0 %v82
    %v84 = vand.u32 %v74, 4294901760
    %85 = vmatpush.msra.mxu0 %v84
    %v86 = vand.u32 %v72, 4294901760
    %87 = vmatpush.msra.mxu0 %v86
    %v88 = vand.u32 %v70, 4294901760
    %89 = vmatpush.msra.mxu0 %v88
    %v90 = vand.u32 %v68, 4294901760
    %91 = vmatpush.msra.mxu0 %v90
    %v92 = vand.u32 %v66, 4294901760
    %93 = vmatpush.msra.mxu0 %v92
    %v94 = vand.u32 %v64, 4294901760
    %95 = vmatpush.msra.mxu0 %v94
    %v96 = vand.u32 %v62, 4294901760
    %97 = vmatpush.msra.mxu0 %v96
    %v98 = vand.u32 %v60, 4294901760
    %99 = vmatpush.msra.mxu0 %v98
    %v100 = vand.u32 %v58, 4294901760
    %101 = vmatpush.msra.mxu0 %v100
    %v102 = vand.u32 %v56, 4294901760
    %103 = vmatpush.msra.mxu0 %v102
    %v104 = vand.u32 %v54, 4294901760
    %105 = vmatpush.msra.mxu0 %v104
    %v106 = vand.u32 %v52, 4294901760
    %107 = vmatpush.msra.mxu0 %v106
    %v108 = vand.u32 %v50, 4294901760
    %109 = vmatpush.msra.mxu0 %v108
    %v110 = vand.u32 %v48, 4294901760
    %111 = vmatpush.msra.mxu0 %v110
    %v112 = vand.u32 %v47, 4294901760
    %v113 = vsub.f32 %v47, %v112
    %v114 = vand.u32 %v113, 4294901760
    %v115 = vsub.f32 %v113, %v114
    %v116 = vand.u32 %v115, 4294901760
    %117 = vmatmul.f32.gmra.mxu0 %v116
    %v118 = vpop.f32.mrf.mxu0
    %v119 = vadd.f32 0.0, %v118
    %120 = vdwg.mxu0
    %v121 = vand.u32 %v78, 4294901760
    %v122 = vsub.f32 %v78, %v121
    %v123 = vand.u32 %v122, 4294901760
    %v124 = vsub.f32 %v122, %v123
    %v125 = vand.u32 %v124, 4294901760
    %126 = vmatpush.msra.mxu0 %v125
    %v127 = vand.u32 %v76, 4294901760
    %v128 = vsub.f32 %v76, %v127
    %v129 = vand.u32 %v128, 4294901760
    %v130 = vsub.f32 %v128, %v129
    %v131 = vand.u32 %v130, 4294901760
    %132 = vmatpush.msra.mxu0 %v131
    %v133 = vand.u32 %v74, 4294901760
    %v134 = vsub.f32 %v74, %v133
    %v135 = vand.u32 %v134, 4294901760
    %v136 = vsub.f32 %v134, %v135
    %v137 = vand.u32 %v136, 4294901760
    %138 = vmatpush.msra.mxu0 %v137
    %v139 = vand.u32 %v72, 4294901760
    %v140 = vsub.f32 %v72, %v139
    %v141 = vand.u32 %v140, 4294901760
    %v142 = vsub.f32 %v140, %v141
    %v143 = vand.u32 %v142, 4294901760
    %144 = vmatpush.msra.mxu0 %v143
    %v145 = vand.u32 %v70, 4294901760
    %v146 = vsub.f32 %v70, %v145
    %v147 = vand.u32 %v146, 4294901760
    %v148 = vsub.f32 %v146, %v147
    %v149 = vand.u32 %v148, 4294901760
    %150 = vmatpush.msra.mxu0 %v149
    %v151 = vand.u32 %v68, 4294901760
    %v152 = vsub.f32 %v68, %v151
    %v153 = vand.u32 %v152, 4294901760
    %v154 = vsub.f32 %v152, %v153
    %v155 = vand.u32 %v154, 4294901760
    %156 = vmatpush.msra.mxu0 %v155
    %v157 = vand.u32 %v66, 4294901760
    %v158 = vsub.f32 %v66, %v157
    %v159 = vand.u32 %v158, 4294901760
    %v160 = vsub.f32 %v158, %v159
    %v161 = vand.u32 %v160, 4294901760
    %162 = vmatpush.msra.mxu0 %v161
    %v163 = vand.u32 %v64, 4294901760
    %v164 = vsub.f32 %v64, %v163
    %v165 = vand.u32 %v164, 4294901760
    %v166 = vsub.f32 %v164, %v165
    %v167 = vand.u32 %v166, 4294901760
    %168 = vmatpush.msra.mxu0 %v167
    %v169 = vand.u32 %v62, 4294901760
    %v170 = vsub.f32 %v62, %v169
    %v171 = vand.u32 %v170, 4294901760
    %v172 = vsub.f32 %v170, %v171
    %v173 = vand.u32 %v172, 4294901760
    %174 = vmatpush.msra.mxu0 %v173
    %v175 = vand.u32 %v60, 4294901760
    %v176 = vsub.f32 %v60, %v175
    %v177 = vand.u32 %v176, 4294901760
    %v178 = vsub.f32 %v176, %v177
    %v179 = vand.u32 %v178, 4294901760
    %180 = vmatpush.msra.mxu0 %v179
    %v181 = vand.u32 %v58, 4294901760
    %v182 = vsub.f32 %v58, %v181
    %v183 = vand.u32 %v182, 4294901760
    %v184 = vsub.f32 %v182, %v183
    %v185 = vand.u32 %v184, 4294901760
    %186 = vmatpush.msra.mxu0 %v185
    %v187 = vand.u32 %v56, 4294901760
    %v188 = vsub.f32 %v56, %v187
    %v189 = vand.u32 %v188, 4294901760
    %v190 = vsub.f32 %v188, %v189
    %v191 = vand.u32 %v190, 4294901760
    %192 = vmatpush.msra.mxu0 %v191
    %v193 = vand.u32 %v54, 4294901760
    %v194 = vsub.f32 %v54, %v193
    %v195 = vand.u32 %v194, 4294901760
    %v196 = vsub.f32 %v194, %v195
    %v197 = vand.u32 %v196, 4294901760
    %198 = vmatpush.msra.mxu0 %v197
    %v199 = vand.u32 %v52, 4294901760
    %v200 = vsub.f32 %v52, %v199
    %v201 = vand.u32 %v200, 4294901760
    %v202 = vsub.f32 %v200, %v201
    %v203 = vand.u32 %v202, 4294901760
    %204 = vmatpush.msra.mxu0 %v203
    %v205 = vand.u32 %v50, 4294901760
    %v206 = vsub.f32 %v50, %v205
    %v207 = vand.u32 %v206, 4294901760
    %v208 = vsub.f32 %v206, %v207
    %v209 = vand.u32 %v208, 4294901760
    %210 = vmatpush.msra.mxu0 %v209
    %v211 = vand.u32 %v48, 4294901760
    %v212 = vsub.f32 %v48, %v211
    %v213 = vand.u32 %v212, 4294901760
    %v214 = vsub.f32 %v212, %v213
    %v215 = vand.u32 %v214, 4294901760
    %216 = vmatpush.msra.mxu0 %v215
    %v217 = vand.u32 %v47, 4294901760
    %218 = vmatmul.f32.gmra.mxu0 %v217
    %v219 = vpop.f32.mrf.mxu0
    %v220 = vadd.f32 %v119, %v219
    %221 = vdwg.mxu0
    %v222 = vand.u32 %v78, 4294901760
    %v223 = vsub.f32 %v78, %v222
    %224 = vmatpush.msra.mxu0 %v223
    %v225 = vand.u32 %v76, 4294901760
    %v226 = vsub.f32 %v76, %v225
    %227 = vmatpush.msra.mxu0 %v226
    %v228 = vand.u32 %v74, 4294901760
    %v229 = vsub.f32 %v74, %v228
    %230 = vmatpush.msra.mxu0 %v229
    %v231 = vand.u32 %v72, 4294901760
    %v232 = vsub.f32 %v72, %v231
    %233 = vmatpush.msra.mxu0 %v232
    %v234 = vand.u32 %v70, 4294901760
    %v235 = vsub.f32 %v70, %v234
    %236 = vmatpush.msra.mxu0 %v235
    %v237 = vand.u32 %v68, 4294901760
    %v238 = vsub.f32 %v68, %v237
    %239 = vmatpush.msra.mxu0 %v238
    %v240 = vand.u32 %v66, 4294901760
    %v241 = vsub.f32 %v66, %v240
    %242 = vmatpush.msra.mxu0 %v241
    %v243 = vand.u32 %v64, 4294901760
    %v244 = vsub.f32 %v64, %v243
    %245 = vmatpush.msra.mxu0 %v244
    %v246 = vand.u32 %v62, 4294901760
    %v247 = vsub.f32 %v62, %v246
    %248 = vmatpush.msra.mxu0 %v247
    %v249 = vand.u32 %v60, 4294901760
    %v250 = vsub.f32 %v60, %v249
    %251 = vmatpush.msra.mxu0 %v250
    %v252 = vand.u32 %v58, 4294901760
    %v253 = vsub.f32 %v58, %v252
    %254 = vmatpush.msra.mxu0 %v253
    %v255 = vand.u32 %v56, 4294901760
    %v256 = vsub.f32 %v56, %v255
    %257 = vmatpush.msra.mxu0 %v256
    %v258 = vand.u32 %v54, 4294901760
    %v259 = vsub.f32 %v54, %v258
    %260 = vmatpush.msra.mxu0 %v259
    %v261 = vand.u32 %v52, 4294901760
    %v262 = vsub.f32 %v52, %v261
    %263 = vmatpush.msra.mxu0 %v262
    %v264 = vand.u32 %v50, 4294901760
    %v265 = vsub.f32 %v50, %v264
    %266 = vmatpush.msra.mxu0 %v265
    %v267 = vand.u32 %v48, 4294901760
    %v268 = vsub.f32 %v48, %v267
    %269 = vmatpush.msra.mxu0 %v268
    %v270 = vand.u32 %v47, 4294901760
    %v271 = vsub.f32 %v47, %v270
    %272 = vmatmul.f32.gmra.mxu0 %v271
    %v273 = vpop.f32.mrf.mxu0
    %v274 = vadd.f32 %v220, %v273
    %275 = vdwg.mxu0
    %v276 = vand.u32 %v78, 4294901760
    %277 = vmatpush.msra.mxu0 %v276
    %v278 = vand.u32 %v76, 4294901760
    %279 = vmatpush.msra.mxu0 %v278
    %v280 = vand.u32 %v74, 4294901760
    %281 = vmatpush.msra.mxu0 %v280
    %v282 = vand.u32 %v72, 4294901760
    %283 = vmatpush.msra.mxu0 %v282
    %v284 = vand.u32 %v70, 4294901760
    %285 = vmatpush.msra.mxu0 %v284
    %v286 = vand.u32 %v68, 4294901760
    %287 = vmatpush.msra.mxu0 %v286
    %v288 = vand.u32 %v66, 4294901760
    %289 = vmatpush.msra.mxu0 %v288
    %v290 = vand.u32 %v64, 4294901760
    %291 = vmatpush.msra.mxu0 %v290
    %v292 = vand.u32 %v62, 4294901760
    %293 = vmatpush.msra.mxu0 %v292
    %v294 = vand.u32 %v60, 4294901760
    %295 = vmatpush.msra.mxu0 %v294
    %v296 = vand.u32 %v58, 4294901760
    %297 = vmatpush.msra.mxu0 %v296
    %v298 = vand.u32 %v56, 4294901760
    %299 = vmatpush.msra.mxu0 %v298
    %v300 = vand.u32 %v54, 4294901760
    %301 = vmatpush.msra.mxu0 %v300
    %v302 = vand.u32 %v52, 4294901760
    %303 = vmatpush.msra.mxu0 %v302
    %v304 = vand.u32 %v50, 4294901760
    %305 = vmatpush.msra.mxu0 %v304
    %v306 = vand.u32 %v48, 4294901760
    %307 = vmatpush.msra.mxu0 %v306
    %v308 = vand.u32 %v47, 4294901760
    %v309 = vsub.f32 %v47, %v308
    %v310 = vand.u32 %v309, 4294901760
    %311 = vmatmul.f32.gmra.mxu0 %v310
    %v312 = vpop.f32.mrf.mxu0
    %v313 = vadd.f32 %v274, %v312
    %314 = vdwg.mxu0
    %v315 = vand.u32 %v78, 4294901760
    %v316 = vsub.f32 %v78, %v315
    %v317 = vand.u32 %v316, 4294901760
    %318 = vmatpush.msra.mxu0 %v317
    %v319 = vand.u32 %v76, 4294901760
    %v320 = vsub.f32 %v76, %v319
    %v321 = vand.u32 %v320, 4294901760
    %322 = vmatpush.msra.mxu0 %v321
    %v323 = vand.u32 %v74, 4294901760
    %v324 = vsub.f32 %v74, %v323
    %v325 = vand.u32 %v324, 4294901760
    %326 = vmatpush.msra.mxu0 %v325
    %v327 = vand.u32 %v72, 4294901760
    %v328 = vsub.f32 %v72, %v327
    %v329 = vand.u32 %v328, 4294901760
    %330 = vmatpush.msra.mxu0 %v329
    %v331 = vand.u32 %v70, 4294901760
    %v332 = vsub.f32 %v70, %v331
    %v333 = vand.u32 %v332, 4294901760
    %334 = vmatpush.msra.mxu0 %v333
    %v335 = vand.u32 %v68, 4294901760
    %v336 = vsub.f32 %v68, %v335
    %v337 = vand.u32 %v336, 4294901760
    %338 = vmatpush.msra.mxu0 %v337
    %v339 = vand.u32 %v66, 4294901760
    %v340 = vsub.f32 %v66, %v339
    %v341 = vand.u32 %v340, 4294901760
    %342 = vmatpush.msra.mxu0 %v341
    %v343 = vand.u32 %v64, 4294901760
    %v344 = vsub.f32 %v64, %v343
    %v345 = vand.u32 %v344, 4294901760
    %346 = vmatpush.msra.mxu0 %v345
    %v347 = vand.u32 %v62, 4294901760
    %v348 = vsub.f32 %v62, %v347
    %v349 = vand.u32 %v348, 4294901760
    %350 = vmatpush.msra.mxu0 %v349
    %v351 = vand.u32 %v60, 4294901760
    %v352 = vsub.f32 %v60, %v351
    %v353 = vand.u32 %v352, 4294901760
    %354 = vmatpush.msra.mxu0 %v353
    %v355 = vand.u32 %v58, 4294901760
    %v356 = vsub.f32 %v58, %v355
    %v357 = vand.u32 %v356, 4294901760
    %358 = vmatpush.msra.mxu0 %v357
    %v359 = vand.u32 %v56, 4294901760
    %v360 = vsub.f32 %v56, %v359
    %v361 = vand.u32 %v360, 4294901760
    %362 = vmatpush.msra.mxu0 %v361
    %v363 = vand.u32 %v54, 4294901760
    %v364 = vsub.f32 %v54, %v363
    %v365 = vand.u32 %v364, 4294901760
    %366 = vmatpush.msra.mxu0 %v365
    %v367 = vand.u32 %v52, 4294901760
    %v368 = vsub.f32 %v52, %v367
    %v369 = vand.u32 %v368, 4294901760
    %370 = vmatpush.msra.mxu0 %v369
    %v371 = vand.u32 %v50, 4294901760
    %v372 = vsub.f32 %v50, %v371
    %v373 = vand.u32 %v372, 4294901760
    %374 = vmatpush.msra.mxu0 %v373
    %v375 = vand.u32 %v48, 4294901760
    %v376 = vsub.f32 %v48, %v375
    %v377 = vand.u32 %v376, 4294901760
    %378 = vmatpush.msra.mxu0 %v377
    %v379 = vand.u32 %v47, 4294901760
    %380 = vmatmul.f32.gmra.mxu0 %v379
    %v381 = vpop.f32.mrf.mxu0
    %v382 = vadd.f32 %v313, %v381
    %383 = vdwg.mxu0
    %v384 = vand.u32 %v78, 4294901760
    %385 = vmatpush.msra.mxu0 %v384
    %v386 = vand.u32 %v76, 4294901760
    %387 = vmatpush.msra.mxu0 %v386
    %v388 = vand.u32 %v74, 4294901760
    %389 = vmatpush.msra.mxu0 %v388
    %v390 = vand.u32 %v72, 4294901760
    %391 = vmatpush.msra.mxu0 %v390
    %v392 = vand.u32 %v70, 4294901760
    %393 = vmatpush.msra.mxu0 %v392
    %v394 = vand.u32 %v68, 4294901760
    %395 = vmatpush.msra.mxu0 %v394
    %v396 = vand.u32 %v66, 4294901760
    %397 = vmatpush.msra.mxu0 %v396
    %v398 = vand.u32 %v64, 4294901760
    %399 = vmatpush.msra.mxu0 %v398
    %v400 = vand.u32 %v62, 4294901760
    %401 = vmatpush.msra.mxu0 %v400
    %v402 = vand.u32 %v60, 4294901760
    %403 = vmatpush.msra.mxu0 %v402
    %v404 = vand.u32 %v58, 4294901760
    %405 = vmatpush.msra.mxu0 %v404
    %v406 = vand.u32 %v56, 4294901760
    %407 = vmatpush.msra.mxu0 %v406
    %v408 = vand.u32 %v54, 4294901760
    %409 = vmatpush.msra.mxu0 %v408
    %v410 = vand.u32 %v52, 4294901760
    %411 = vmatpush.msra.mxu0 %v410
    %v412 = vand.u32 %v50, 4294901760
    %413 = vmatpush.msra.mxu0 %v412
    %v414 = vand.u32 %v48, 4294901760
    %415 = vmatpush.msra.mxu0 %v414
    %v416 = vand.u32 %v47, 4294901760
    %417 = vmatmul.f32.gmra.mxu0 %v416
    %v418 = vpop.f32.mrf.mxu0
    %v419 = vadd.f32 %v382, %v418
    %420 = vdwg.mxu0
    %v421 = vand.u32 %v79, 4294901760
    %422 = vmatpush.msra.mxu0 %v421
    %v423 = vand.u32 %v77, 4294901760
    %424 = vmatpush.msra.mxu0 %v423
    %v425 = vand.u32 %v75, 4294901760
    %426 = vmatpush.msra.mxu0 %v425
    %v427 = vand.u32 %v73, 4294901760
    %428 = vmatpush.msra.mxu0 %v427
    %v429 = vand.u32 %v71, 4294901760
    %430 = vmatpush.msra.mxu0 %v429
    %v431 = vand.u32 %v69, 4294901760
    %432 = vmatpush.msra.mxu0 %v431
    %v433 = vand.u32 %v67, 4294901760
    %434 = vmatpush.msra.mxu0 %v433
    %v435 = vand.u32 %v65, 4294901760
    %436 = vmatpush.msra.mxu0 %v435
    %v437 = vand.u32 %v63, 4294901760
    %438 = vmatpush.msra.mxu0 %v437
    %v439 = vand.u32 %v61, 4294901760
    %440 = vmatpush.msra.mxu0 %v439
    %v441 = vand.u32 %v59, 4294901760
    %442 = vmatpush.msra.mxu0 %v441
    %v443 = vand.u32 %v57, 4294901760
    %444 = vmatpush.msra.mxu0 %v443
    %v445 = vand.u32 %v55, 4294901760
    %446 = vmatpush.msra.mxu0 %v445
    %v447 = vand.u32 %v53, 4294901760
    %448 = vmatpush.msra.mxu0 %v447
    %v449 = vand.u32 %v51, 4294901760
    %450 = vmatpush.msra.mxu0 %v449
    %v451 = vand.u32 %v49, 4294901760
    %452 = vmatpush.msra.mxu0 %v451
    %v453 = vand.u32 %v47, 4294901760
    %v454 = vsub.f32 %v47, %v453
    %v455 = vand.u32 %v454, 4294901760
    %v456 = vsub.f32 %v454, %v455
    %v457 = vand.u32 %v456, 4294901760
    %458 = vmatmul.f32.gmra.mxu0 %v457
    %v459 = vpop.f32.mrf.mxu0
    %v460 = vadd.f32 0.0, %v459
    %461 = vdwg.mxu0
    %v462 = vand.u32 %v79, 4294901760
    %v463 = vsub.f32 %v79, %v462
    %v464 = vand.u32 %v463, 4294901760
    %v465 = vsub.f32 %v463, %v464
    %v466 = vand.u32 %v465, 4294901760
    %467 = vmatpush.msra.mxu0 %v466
    %v468 = vand.u32 %v77, 4294901760
    %v469 = vsub.f32 %v77, %v468
    %v470 = vand.u32 %v469, 4294901760
    %v471 = vsub.f32 %v469, %v470
    %v472 = vand.u32 %v471, 4294901760
    %473 = vmatpush.msra.mxu0 %v472
    %v474 = vand.u32 %v75, 4294901760
    %v475 = vsub.f32 %v75, %v474
    %v476 = vand.u32 %v475, 4294901760
    %v477 = vsub.f32 %v475, %v476
    %v478 = vand.u32 %v477, 4294901760
    %479 = vmatpush.msra.mxu0 %v478
    %v480 = vand.u32 %v73, 4294901760
    %v481 = vsub.f32 %v73, %v480
    %v482 = vand.u32 %v481, 4294901760
    %v483 = vsub.f32 %v481, %v482
    %v484 = vand.u32 %v483, 4294901760
    %485 = vmatpush.msra.mxu0 %v484
    %v486 = vand.u32 %v71, 4294901760
    %v487 = vsub.f32 %v71, %v486
    %v488 = vand.u32 %v487, 4294901760
    %v489 = vsub.f32 %v487, %v488
    %v490 = vand.u32 %v489, 4294901760
    %491 = vmatpush.msra.mxu0 %v490
    %v492 = vand.u32 %v69, 4294901760
    %v493 = vsub.f32 %v69, %v492
    %v494 = vand.u32 %v493, 4294901760
    %v495 = vsub.f32 %v493, %v494
    %v496 = vand.u32 %v495, 4294901760
    %497 = vmatpush.msra.mxu0 %v496
    %v498 = vand.u32 %v67, 4294901760
    %v499 = vsub.f32 %v67, %v498
    %v500 = vand.u32 %v499, 4294901760
    %v501 = vsub.f32 %v499, %v500
    %v502 = vand.u32 %v501, 4294901760
    %503 = vmatpush.msra.mxu0 %v502
    %v504 = vand.u32 %v65, 4294901760
    %v505 = vsub.f32 %v65, %v504
    %v506 = vand.u32 %v505, 4294901760
    %v507 = vsub.f32 %v505, %v506
    %v508 = vand.u32 %v507, 4294901760
    %509 = vmatpush.msra.mxu0 %v508
    %v510 = vand.u32 %v63, 4294901760
    %v511 = vsub.f32 %v63, %v510
    %v512 = vand.u32 %v511, 4294901760
    %v513 = vsub.f32 %v511, %v512
    %v514 = vand.u32 %v513, 4294901760
    %515 = vmatpush.msra.mxu0 %v514
    %v516 = vand.u32 %v61, 4294901760
    %v517 = vsub.f32 %v61, %v516
    %v518 = vand.u32 %v517, 4294901760
    %v519 = vsub.f32 %v517, %v518
    %v520 = vand.u32 %v519, 4294901760
    %521 = vmatpush.msra.mxu0 %v520
    %v522 = vand.u32 %v59, 4294901760
    %v523 = vsub.f32 %v59, %v522
    %v524 = vand.u32 %v523, 4294901760
    %v525 = vsub.f32 %v523, %v524
    %v526 = vand.u32 %v525, 4294901760
    %527 = vmatpush.msra.mxu0 %v526
    %v528 = vand.u32 %v57, 4294901760
    %v529 = vsub.f32 %v57, %v528
    %v530 = vand.u32 %v529, 4294901760
    %v531 = vsub.f32 %v529, %v530
    %v532 = vand.u32 %v531, 4294901760
    %533 = vmatpush.msra.mxu0 %v532
    %v534 = vand.u32 %v55, 4294901760
    %v535 = vsub.f32 %v55, %v534
    %v536 = vand.u32 %v535, 4294901760
    %v537 = vsub.f32 %v535, %v536
    %v538 = vand.u32 %v537, 4294901760
    %539 = vmatpush.msra.mxu0 %v538
    %v540 = vand.u32 %v53, 4294901760
    %v541 = vsub.f32 %v53, %v540
    %v542 = vand.u32 %v541, 4294901760
    %v543 = vsub.f32 %v541, %v542
    %v544 = vand.u32 %v543, 4294901760
    %545 = vmatpush.msra.mxu0 %v544
    %v546 = vand.u32 %v51, 4294901760
    %v547 = vsub.f32 %v51, %v546
    %v548 = vand.u32 %v547, 4294901760
    %v549 = vsub.f32 %v547, %v548
    %v550 = vand.u32 %v549, 4294901760
    %551 = vmatpush.msra.mxu0 %v550
    %v552 = vand.u32 %v49, 4294901760
    %v553 = vsub.f32 %v49, %v552
    %v554 = vand.u32 %v553, 4294901760
    %v555 = vsub.f32 %v553, %v554
    %v556 = vand.u32 %v555, 4294901760
    %557 = vmatpush.msra.mxu0 %v556
    %v558 = vand.u32 %v47, 4294901760
    %559 = vmatmul.f32.gmra.mxu0 %v558
    %v560 = vpop.f32.mrf.mxu0
    %v561 = vadd.f32 %v460, %v560
    %562 = vdwg.mxu0
    %v563 = vand.u32 %v79, 4294901760
    %v564 = vsub.f32 %v79, %v563
    %565 = vmatpush.msra.mxu0 %v564
    %v566 = vand.u32 %v77, 4294901760
    %v567 = vsub.f32 %v77, %v566
    %568 = vmatpush.msra.mxu0 %v567
    %v569 = vand.u32 %v75, 4294901760
    %v570 = vsub.f32 %v75, %v569
    %571 = vmatpush.msra.mxu0 %v570
    %v572 = vand.u32 %v73, 4294901760
    %v573 = vsub.f32 %v73, %v572
    %574 = vmatpush.msra.mxu0 %v573
    %v575 = vand.u32 %v71, 4294901760
    %v576 = vsub.f32 %v71, %v575
    %577 = vmatpush.msra.mxu0 %v576
    %v578 = vand.u32 %v69, 4294901760
    %v579 = vsub.f32 %v69, %v578
    %580 = vmatpush.msra.mxu0 %v579
    %v581 = vand.u32 %v67, 4294901760
    %v582 = vsub.f32 %v67, %v581
    %583 = vmatpush.msra.mxu0 %v582
    %v584 = vand.u32 %v65, 4294901760
    %v585 = vsub.f32 %v65, %v584
    %586 = vmatpush.msra.mxu0 %v585
    %v587 = vand.u32 %v63, 4294901760
    %v588 = vsub.f32 %v63, %v587
    %589 = vmatpush.msra.mxu0 %v588
    %v590 = vand.u32 %v61, 4294901760
    %v591 = vsub.f32 %v61, %v590
    %592 = vmatpush.msra.mxu0 %v591
    %v593 = vand.u32 %v59, 4294901760
    %v594 = vsub.f32 %v59, %v593
    %595 = vmatpush.msra.mxu0 %v594
    %v596 = vand.u32 %v57, 4294901760
    %v597 = vsub.f32 %v57, %v596
    %598 = vmatpush.msra.mxu0 %v597
    %v599 = vand.u32 %v55, 4294901760
    %v600 = vsub.f32 %v55, %v599
    %601 = vmatpush.msra.mxu0 %v600
    %v602 = vand.u32 %v53, 4294901760
    %v603 = vsub.f32 %v53, %v602
    %604 = vmatpush.msra.mxu0 %v603
    %v605 = vand.u32 %v51, 4294901760
    %v606 = vsub.f32 %v51, %v605
    %607 = vmatpush.msra.mxu0 %v606
    %v608 = vand.u32 %v49, 4294901760
    %v609 = vsub.f32 %v49, %v608
    %610 = vmatpush.msra.mxu0 %v609
    %v611 = vand.u32 %v47, 4294901760
    %v612 = vsub.f32 %v47, %v611
    %613 = vmatmul.f32.gmra.mxu0 %v612
    %v614 = vpop.f32.mrf.mxu0
    %v615 = vadd.f32 %v561, %v614
    %616 = vdwg.mxu0
    %v617 = vand.u32 %v79, 4294901760
    %618 = vmatpush.msra.mxu0 %v617
    %v619 = vand.u32 %v77, 4294901760
    %620 = vmatpush.msra.mxu0 %v619
    %v621 = vand.u32 %v75, 4294901760
    %622 = vmatpush.msra.mxu0 %v621
    %v623 = vand.u32 %v73, 4294901760
    %624 = vmatpush.msra.mxu0 %v623
    %v625 = vand.u32 %v71, 4294901760
    %626 = vmatpush.msra.mxu0 %v625
    %v627 = vand.u32 %v69, 4294901760
    %628 = vmatpush.msra.mxu0 %v627
    %v629 = vand.u32 %v67, 4294901760
    %630 = vmatpush.msra.mxu0 %v629
    %v631 = vand.u32 %v65, 4294901760
    %632 = vmatpush.msra.mxu0 %v631
    %v633 = vand.u32 %v63, 4294901760
    %634 = vmatpush.msra.mxu0 %v633
    %v635 = vand.u32 %v61, 4294901760
    %636 = vmatpush.msra.mxu0 %v635
    %v637 = vand.u32 %v59, 4294901760
    %638 = vmatpush.msra.mxu0 %v637
    %v639 = vand.u32 %v57, 4294901760
    %640 = vmatpush.msra.mxu0 %v639
    %v641 = vand.u32 %v55, 4294901760
    %642 = vmatpush.msra.mxu0 %v641
    %v643 = vand.u32 %v53, 4294901760
    %644 = vmatpush.msra.mxu0 %v643
    %v645 = vand.u32 %v51, 4294901760
    %646 = vmatpush.msra.mxu0 %v645
    %v647 = vand.u32 %v49, 4294901760
    %648 = vmatpush.msra.mxu0 %v647
    %v649 = vand.u32 %v47, 4294901760
    %v650 = vsub.f32 %v47, %v649
    %v651 = vand.u32 %v650, 4294901760
    %652 = vmatmul.f32.gmra.mxu0 %v651
    %v653 = vpop.f32.mrf.mxu0
    %v654 = vadd.f32 %v615, %v653
    %655 = vdwg.mxu0
    %v656 = vand.u32 %v79, 4294901760
    %v657 = vsub.f32 %v79, %v656
    %v658 = vand.u32 %v657, 4294901760
    %659 = vmatpush.msra.mxu0 %v658
    %v660 = vand.u32 %v77, 4294901760
    %v661 = vsub.f32 %v77, %v660
    %v662 = vand.u32 %v661, 4294901760
    %663 = vmatpush.msra.mxu0 %v662
    %v664 = vand.u32 %v75, 4294901760
    %v665 = vsub.f32 %v75, %v664
    %v666 = vand.u32 %v665, 4294901760
    %667 = vmatpush.msra.mxu0 %v666
    %v668 = vand.u32 %v73, 4294901760
    %v669 = vsub.f32 %v73, %v668
    %v670 = vand.u32 %v669, 4294901760
    %671 = vmatpush.msra.mxu0 %v670
    %v672 = vand.u32 %v71, 4294901760
    %v673 = vsub.f32 %v71, %v672
    %v674 = vand.u32 %v673, 4294901760
    %675 = vmatpush.msra.mxu0 %v674
    %v676 = vand.u32 %v69, 4294901760
    %v677 = vsub.f32 %v69, %v676
    %v678 = vand.u32 %v677, 4294901760
    %679 = vmatpush.msra.mxu0 %v678
    %v680 = vand.u32 %v67, 4294901760
    %v681 = vsub.f32 %v67, %v680
    %v682 = vand.u32 %v681, 4294901760
    %683 = vmatpush.msra.mxu0 %v682
    %v684 = vand.u32 %v65, 4294901760
    %v685 = vsub.f32 %v65, %v684
    %v686 = vand.u32 %v685, 4294901760
    %687 = vmatpush.msra.mxu0 %v686
    %v688 = vand.u32 %v63, 4294901760
    %v689 = vsub.f32 %v63, %v688
    %v690 = vand.u32 %v689, 4294901760
    %691 = vmatpush.msra.mxu0 %v690
    %v692 = vand.u32 %v61, 4294901760
    %v693 = vsub.f32 %v61, %v692
    %v694 = vand.u32 %v693, 4294901760
    %695 = vmatpush.msra.mxu0 %v694
    %v696 = vand.u32 %v59, 4294901760
    %v697 = vsub.f32 %v59, %v696
    %v698 = vand.u32 %v697, 4294901760
    %699 = vmatpush.msra.mxu0 %v698
    %v700 = vand.u32 %v57, 4294901760
    %v701 = vsub.f32 %v57, %v700
    %v702 = vand.u32 %v701, 4294901760
    %703 = vmatpush.msra.mxu0 %v702
    %v704 = vand.u32 %v55, 4294901760
    %v705 = vsub.f32 %v55, %v704
    %v706 = vand.u32 %v705, 4294901760
    %707 = vmatpush.msra.mxu0 %v706
    %v708 = vand.u32 %v53, 4294901760
    %v709 = vsub.f32 %v53, %v708
    %v710 = vand.u32 %v709, 4294901760
    %711 = vmatpush.msra.mxu0 %v710
    %v712 = vand.u32 %v51, 4294901760
    %v713 = vsub.f32 %v51, %v712
    %v714 = vand.u32 %v713, 4294901760
    %715 = vmatpush.msra.mxu0 %v714
    %v716 = vand.u32 %v49, 4294901760
    %v717 = vsub.f32 %v49, %v716
    %v718 = vand.u32 %v717, 4294901760
    %719 = vmatpush.msra.mxu0 %v718
    %v720 = vand.u32 %v47, 4294901760
    %721 = vmatmul.f32.gmra.mxu0 %v720
    %v722 = vpop.f32.mrf.mxu0
    %v723 = vadd.f32 %v654, %v722
    %724 = vdwg.mxu0
    %v725 = vand.u32 %v79, 4294901760
    %726 = vmatpush.msra.mxu0 %v725
    %v727 = vand.u32 %v77, 4294901760
    %728 = vmatpush.msra.mxu0 %v727
    %v729 = vand.u32 %v75, 4294901760
    %730 = vmatpush.msra.mxu0 %v729
    %v731 = vand.u32 %v73, 4294901760
    %732 = vmatpush.msra.mxu0 %v731
    %v733 = vand.u32 %v71, 4294901760
    %734 = vmatpush.msra.mxu0 %v733
    %v735 = vand.u32 %v69, 4294901760
    %736 = vmatpush.msra.mxu0 %v735
    %v737 = vand.u32 %v67, 4294901760
    %738 = vmatpush.msra.mxu0 %v737
    %v739 = vand.u32 %v65, 4294901760
    %740 = vmatpush.msra.mxu0 %v739
    %v741 = vand.u32 %v63, 4294901760
    %742 = vmatpush.msra.mxu0 %v741
    %v743 = vand.u32 %v61, 4294901760
    %744 = vmatpush.msra.mxu0 %v743
    %v745 = vand.u32 %v59, 4294901760
    %746 = vmatpush.msra.mxu0 %v745
    %v747 = vand.u32 %v57, 4294901760
    %748 = vmatpush.msra.mxu0 %v747
    %v749 = vand.u32 %v55, 4294901760
    %750 = vmatpush.msra.mxu0 %v749
    %v751 = vand.u32 %v53, 4294901760
    %752 = vmatpush.msra.mxu0 %v751
    %v753 = vand.u32 %v51, 4294901760
    %754 = vmatpush.msra.mxu0 %v753
    %v755 = vand.u32 %v49, 4294901760
    %756 = vmatpush.msra.mxu0 %v755
    %v757 = vand.u32 %v47, 4294901760
    %758 = vmatmul.f32.gmra.mxu0 %v757
    %v759 = vpop.f32.mrf.mxu0
    %v760 = vadd.f32 %v723, %v759
    %761 = vdwg.mxu0
    %v762 = vld [vmem:[%s3] sm:$0x1]
    %v764 = vperm.slane %v762, 0
    %v766 = vadd.f32 %v764, %v419
    %v767 = vtanh.pop %v766
    %v768 = vld [vmem:[%s4] sm:$0x1]
    %v770 = vperm.slane %v768, 0
    %v772 = vadd.f32 %v770, %v760
    %v773 = vld [vmem:[%s2] sm:$0xff]
    %v774 = vld [vmem:[%s2 + $0x8] sm:$0xff]
    %v775 = vld [vmem:[%s2 + $0x10] sm:$0xff]
    %v776 = vld [vmem:[%s2 + $0x18] sm:$0xff]
    %v777 = vld [vmem:[%s2 + $0x20] sm:$0xff]
    %v778 = vld [vmem:[%s2 + $0x28] sm:$0xff]
    %v779 = vld [vmem:[%s2 + $0x30] sm:$0xff]
    %v780 = vld [vmem:[%s2 + $0x38] sm:$0xff]
    %v781 = vld [vmem:[%s2 + $0x40] sm:$0xff]
    %v782 = vld [vmem:[%s2 + $0x48] sm:$0xff]
    %v783 = vld [vmem:[%s2 + $0x50] sm:$0xff]
    %v784 = vld [vmem:[%s2 + $0x58] sm:$0xff]
    %v785 = vld [vmem:[%s2 + $0x60] sm:$0xff]
    %v786 = vld [vmem:[%s2 + $0x68] sm:$0xff]
    %v787 = vld [vmem:[%s2 + $0x70] sm:$0xff]
    %v788 = vld [vmem:[%s2 + $0x78] sm:$0xff]
    %v789 = vand.u32 %v788, 4294901760
    %790 = vmatpush.msra.mxu0 %v789
    %v791 = vand.u32 %v787, 4294901760
    %792 = vmatpush.msra.mxu0 %v791
    %v793 = vand.u32 %v786, 4294901760
    %794 = vmatpush.msra.mxu0 %v793
    %v795 = vand.u32 %v785, 4294901760
    %796 = vmatpush.msra.mxu0 %v795
    %v797 = vand.u32 %v784, 4294901760
    %798 = vmatpush.msra.mxu0 %v797
    %v799 = vand.u32 %v783, 4294901760
    %800 = vmatpush.msra.mxu0 %v799
    %v801 = vand.u32 %v782, 4294901760
    %802 = vmatpush.msra.mxu0 %v801
    %v803 = vand.u32 %v781, 4294901760
    %804 = vmatpush.msra.mxu0 %v803
    %v805 = vand.u32 %v780, 4294901760
    %806 = vmatpush.msra.mxu0 %v805
    %v807 = vand.u32 %v779, 4294901760
    %808 = vmatpush.msra.mxu0 %v807
    %v809 = vand.u32 %v778, 4294901760
    %810 = vmatpush.msra.mxu0 %v809
    %v811 = vand.u32 %v777, 4294901760
    %812 = vmatpush.msra.mxu0 %v811
    %v813 = vand.u32 %v776, 4294901760
    %814 = vmatpush.msra.mxu0 %v813
    %v815 = vand.u32 %v775, 4294901760
    %816 = vmatpush.msra.mxu0 %v815
    %v817 = vand.u32 %v774, 4294901760
    %818 = vmatpush.msra.mxu0 %v817
    %v819 = vand.u32 %v773, 4294901760
    %820 = vmatpush.msra.mxu0 %v819
    %v821 = vand.u32 %v767, 4294901760
    %v822 = vsub.f32 %v767, %v821
    %v823 = vand.u32 %v822, 4294901760
    %v824 = vsub.f32 %v822, %v823
    %v825 = vand.u32 %v824, 4294901760
    %826 = vmatmul.f32.gmra.mxu0 %v825
    %v827 = vpop.f32.mrf.mxu0
    %v828 = vadd.f32 0.0, %v827
    %829 = vdwg.mxu0
    %v830 = vand.u32 %v788, 4294901760
    %v831 = vsub.f32 %v788, %v830
    %v832 = vand.u32 %v831, 4294901760
    %v833 = vsub.f32 %v831, %v832
    %v834 = vand.u32 %v833, 4294901760
    %835 = vmatpush.msra.mxu0 %v834
    %v836 = vand.u32 %v787, 4294901760
    %v837 = vsub.f32 %v787, %v836
    %v838 = vand.u32 %v837, 4294901760
    %v839 = vsub.f32 %v837, %v838
    %v840 = vand.u32 %v839, 4294901760
    %841 = vmatpush.msra.mxu0 %v840
    %v842 = vand.u32 %v786, 4294901760
    %v843 = vsub.f32 %v786, %v842
    %v844 = vand.u32 %v843, 4294901760
    %v845 = vsub.f32 %v843, %v844
    %v846 = vand.u32 %v845, 4294901760
    %847 = vmatpush.msra.mxu0 %v846
    %v848 = vand.u32 %v785, 4294901760
    %v849 = vsub.f32 %v785, %v848
    %v850 = vand.u32 %v849, 4294901760
    %v851 = vsub.f32 %v849, %v850
    %v852 = vand.u32 %v851, 4294901760
    %853 = vmatpush.msra.mxu0 %v852
    %v854 = vand.u32 %v784, 4294901760
    %v855 = vsub.f32 %v784, %v854
    %v856 = vand.u32 %v855, 4294901760
    %v857 = vsub.f32 %v855, %v856
    %v858 = vand.u32 %v857, 4294901760
    %859 = vmatpush.msra.mxu0 %v858
    %v860 = vand.u32 %v783, 4294901760
    %v861 = vsub.f32 %v783, %v860
    %v862 = vand.u32 %v861, 4294901760
    %v863 = vsub.f32 %v861, %v862
    %v864 = vand.u32 %v863, 4294901760
    %865 = vmatpush.msra.mxu0 %v864
    %v866 = vand.u32 %v782, 4294901760
    %v867 = vsub.f32 %v782, %v866
    %v868 = vand.u32 %v867, 4294901760
    %v869 = vsub.f32 %v867, %v868
    %v870 = vand.u32 %v869, 4294901760
    %871 = vmatpush.msra.mxu0 %v870
    %v872 = vand.u32 %v781, 4294901760
    %v873 = vsub.f32 %v781, %v872
    %v874 = vand.u32 %v873, 4294901760
    %v875 = vsub.f32 %v873, %v874
    %v876 = vand.u32 %v875, 4294901760
    %877 = vmatpush.msra.mxu0 %v876
    %v878 = vand.u32 %v780, 4294901760
    %v879 = vsub.f32 %v780, %v878
    %v880 = vand.u32 %v879, 4294901760
    %v881 = vsub.f32 %v879, %v880
    %v882 = vand.u32 %v881, 4294901760
    %883 = vmatpush.msra.mxu0 %v882
    %v884 = vand.u32 %v779, 4294901760
    %v885 = vsub.f32 %v779, %v884
    %v886 = vand.u32 %v885, 4294901760
    %v887 = vsub.f32 %v885, %v886
    %v888 = vand.u32 %v887, 4294901760
    %889 = vmatpush.msra.mxu0 %v888
    %v890 = vand.u32 %v778, 4294901760
    %v891 = vsub.f32 %v778, %v890
    %v892 = vand.u32 %v891, 4294901760
    %v893 = vsub.f32 %v891, %v892
    %v894 = vand.u32 %v893, 4294901760
    %895 = vmatpush.msra.mxu0 %v894
    %v896 = vand.u32 %v777, 4294901760
    %v897 = vsub.f32 %v777, %v896
    %v898 = vand.u32 %v897, 4294901760
    %v899 = vsub.f32 %v897, %v898
    %v900 = vand.u32 %v899, 4294901760
    %901 = vmatpush.msra.mxu0 %v900
    %v902 = vand.u32 %v776, 4294901760
    %v903 = vsub.f32 %v776, %v902
    %v904 = vand.u32 %v903, 4294901760
    %v905 = vsub.f32 %v903, %v904
    %v906 = vand.u32 %v905, 4294901760
    %907 = vmatpush.msra.mxu0 %v906
    %v908 = vand.u32 %v775, 4294901760
    %v909 = vsub.f32 %v775, %v908
    %v910 = vand.u32 %v909, 4294901760
    %v911 = vsub.f32 %v909, %v910
    %v912 = vand.u32 %v911, 4294901760
    %913 = vmatpush.msra.mxu0 %v912
    %v914 = vand.u32 %v774, 4294901760
    %v915 = vsub.f32 %v774, %v914
    %v916 = vand.u32 %v915, 4294901760
    %v917 = vsub.f32 %v915, %v916
    %v918 = vand.u32 %v917, 4294901760
    %919 = vmatpush.msra.mxu0 %v918
    %v920 = vand.u32 %v773, 4294901760
    %v921 = vsub.f32 %v773, %v920
    %v922 = vand.u32 %v921, 4294901760
    %v923 = vsub.f32 %v921, %v922
    %v924 = vand.u32 %v923, 4294901760
    %925 = vmatpush.msra.mxu0 %v924
    %v926 = vand.u32 %v767, 4294901760
    %927 = vmatmul.f32.gmra.mxu0 %v926
    %v928 = vpop.f32.mrf.mxu0
    %v929 = vadd.f32 %v828, %v928
    %930 = vdwg.mxu0
    %v931 = vand.u32 %v788, 4294901760
    %v932 = vsub.f32 %v788, %v931
    %933 = vmatpush.msra.mxu0 %v932
    %v934 = vand.u32 %v787, 4294901760
    %v935 = vsub.f32 %v787, %v934
    %936 = vmatpush.msra.mxu0 %v935
    %v937 = vand.u32 %v786, 4294901760
    %v938 = vsub.f32 %v786, %v937
    %939 = vmatpush.msra.mxu0 %v938
    %v940 = vand.u32 %v785, 4294901760
    %v941 = vsub.f32 %v785, %v940
    %942 = vmatpush.msra.mxu0 %v941
    %v943 = vand.u32 %v784, 4294901760
    %v944 = vsub.f32 %v784, %v943
    %945 = vmatpush.msra.mxu0 %v944
    %v946 = vand.u32 %v783, 4294901760
    %v947 = vsub.f32 %v783, %v946
    %948 = vmatpush.msra.mxu0 %v947
    %v949 = vand.u32 %v782, 4294901760
    %v950 = vsub.f32 %v782, %v949
    %951 = vmatpush.msra.mxu0 %v950
    %v952 = vand.u32 %v781, 4294901760
    %v953 = vsub.f32 %v781, %v952
    %954 = vmatpush.msra.mxu0 %v953
    %v955 = vand.u32 %v780, 4294901760
    %v956 = vsub.f32 %v780, %v955
    %957 = vmatpush.msra.mxu0 %v956
    %v958 = vand.u32 %v779, 4294901760
    %v959 = vsub.f32 %v779, %v958
    %960 = vmatpush.msra.mxu0 %v959
    %v961 = vand.u32 %v778, 4294901760
    %v962 = vsub.f32 %v778, %v961
    %963 = vmatpush.msra.mxu0 %v962
    %v964 = vand.u32 %v777, 4294901760
    %v965 = vsub.f32 %v777, %v964
    %966 = vmatpush.msra.mxu0 %v965
    %v967 = vand.u32 %v776, 4294901760
    %v968 = vsub.f32 %v776, %v967
    %969 = vmatpush.msra.mxu0 %v968
    %v970 = vand.u32 %v775, 4294901760
    %v971 = vsub.f32 %v775, %v970
    %972 = vmatpush.msra.mxu0 %v971
    %v973 = vand.u32 %v774, 4294901760
    %v974 = vsub.f32 %v774, %v973
    %975 = vmatpush.msra.mxu0 %v974
    %v976 = vand.u32 %v773, 4294901760
    %v977 = vsub.f32 %v773, %v976
    %978 = vmatpush.msra.mxu0 %v977
    %v979 = vand.u32 %v767, 4294901760
    %v980 = vsub.f32 %v767, %v979
    %981 = vmatmul.f32.gmra.mxu0 %v980
    %v982 = vpop.f32.mrf.mxu0
    %v983 = vadd.f32 %v929, %v982
    %984 = vdwg.mxu0
    %v985 = vand.u32 %v788, 4294901760
    %986 = vmatpush.msra.mxu0 %v985
    %v987 = vand.u32 %v787, 4294901760
    %988 = vmatpush.msra.mxu0 %v987
    %v989 = vand.u32 %v786, 4294901760
    %990 = vmatpush.msra.mxu0 %v989
    %v991 = vand.u32 %v785, 4294901760
    %992 = vmatpush.msra.mxu0 %v991
    %v993 = vand.u32 %v784, 4294901760
    %994 = vmatpush.msra.mxu0 %v993
    %v995 = vand.u32 %v783, 4294901760
    %996 = vmatpush.msra.mxu0 %v995
    %v997 = vand.u32 %v782, 4294901760
    %998 = vmatpush.msra.mxu0 %v997
    %v999 = vand.u32 %v781, 4294901760
    %1000 = vmatpush.msra.mxu0 %v999
    %v1001 = vand.u32 %v780, 4294901760
    %1002 = vmatpush.msra.mxu0 %v1001
    %v1003 = vand.u32 %v779, 4294901760
    %1004 = vmatpush.msra.mxu0 %v1003
    %v1005 = vand.u32 %v778, 4294901760
    %1006 = vmatpush.msra.mxu0 %v1005
    %v1007 = vand.u32 %v777, 4294901760
    %1008 = vmatpush.msra.mxu0 %v1007
    %v1009 = vand.u32 %v776, 4294901760
    %1010 = vmatpush.msra.mxu0 %v1009
    %v1011 = vand.u32 %v775, 4294901760
    %1012 = vmatpush.msra.mxu0 %v1011
    %v1013 = vand.u32 %v774, 4294901760
    %1014 = vmatpush.msra.mxu0 %v1013
    %v1015 = vand.u32 %v773, 4294901760
    %1016 = vmatpush.msra.mxu0 %v1015
    %v1017 = vand.u32 %v767, 4294901760
    %v1018 = vsub.f32 %v767, %v1017
    %v1019 = vand.u32 %v1018, 4294901760
    %1020 = vmatmul.f32.gmra.mxu0 %v1019
    %v1021 = vpop.f32.mrf.mxu0
    %v1022 = vadd.f32 %v983, %v1021
    %1023 = vdwg.mxu0
    %v1024 = vand.u32 %v788, 4294901760
    %v1025 = vsub.f32 %v788, %v1024
    %v1026 = vand.u32 %v1025, 4294901760
    %1027 = vmatpush.msra.mxu0 %v1026
    %v1028 = vand.u32 %v787, 4294901760
    %v1029 = vsub.f32 %v787, %v1028
    %v1030 = vand.u32 %v1029, 4294901760
    %1031 = vmatpush.msra.mxu0 %v1030
    %v1032 = vand.u32 %v786, 4294901760
    %v1033 = vsub.f32 %v786, %v1032
    %v1034 = vand.u32 %v1033, 4294901760
    %1035 = vmatpush.msra.mxu0 %v1034
    %v1036 = vand.u32 %v785, 4294901760
    %v1037 = vsub.f32 %v785, %v1036
    %v1038 = vand.u32 %v1037, 4294901760
    %1039 = vmatpush.msra.mxu0 %v1038
    %v1040 = vand.u32 %v784, 4294901760
    %v1041 = vsub.f32 %v784, %v1040
    %v1042 = vand.u32 %v1041, 4294901760
    %1043 = vmatpush.msra.mxu0 %v1042
    %v1044 = vand.u32 %v783, 4294901760
    %v1045 = vsub.f32 %v783, %v1044
    %v1046 = vand.u32 %v1045, 4294901760
    %1047 = vmatpush.msra.mxu0 %v1046
    %v1048 = vand.u32 %v782, 4294901760
    %v1049 = vsub.f32 %v782, %v1048
    %v1050 = vand.u32 %v1049, 4294901760
    %1051 = vmatpush.msra.mxu0 %v1050
    %v1052 = vand.u32 %v781, 4294901760
    %v1053 = vsub.f32 %v781, %v1052
    %v1054 = vand.u32 %v1053, 4294901760
    %1055 = vmatpush.msra.mxu0 %v1054
    %v1056 = vand.u32 %v780, 4294901760
    %v1057 = vsub.f32 %v780, %v1056
    %v1058 = vand.u32 %v1057, 4294901760
    %1059 = vmatpush.msra.mxu0 %v1058
    %v1060 = vand.u32 %v779, 4294901760
    %v1061 = vsub.f32 %v779, %v1060
    %v1062 = vand.u32 %v1061, 4294901760
    %1063 = vmatpush.msra.mxu0 %v1062
    %v1064 = vand.u32 %v778, 4294901760
    %v1065 = vsub.f32 %v778, %v1064
    %v1066 = vand.u32 %v1065, 4294901760
    %1067 = vmatpush.msra.mxu0 %v1066
    %v1068 = vand.u32 %v777, 4294901760
    %v1069 = vsub.f32 %v777, %v1068
    %v1070 = vand.u32 %v1069, 4294901760
    %1071 = vmatpush.msra.mxu0 %v1070
    %v1072 = vand.u32 %v776, 4294901760
    %v1073 = vsub.f32 %v776, %v1072
    %v1074 = vand.u32 %v1073, 4294901760
    %1075 = vmatpush.msra.mxu0 %v1074
    %v1076 = vand.u32 %v775, 4294901760
    %v1077 = vsub.f32 %v775, %v1076
    %v1078 = vand.u32 %v1077, 4294901760
    %1079 = vmatpush.msra.mxu0 %v1078
    %v1080 = vand.u32 %v774, 4294901760
    %v1081 = vsub.f32 %v774, %v1080
    %v1082 = vand.u32 %v1081, 4294901760
    %1083 = vmatpush.msra.mxu0 %v1082
    %v1084 = vand.u32 %v773, 4294901760
    %v1085 = vsub.f32 %v773, %v1084
    %v1086 = vand.u32 %v1085, 4294901760
    %1087 = vmatpush.msra.mxu0 %v1086
    %v1088 = vand.u32 %v767, 4294901760
    %1089 = vmatmul.f32.gmra.mxu0 %v1088
    %v1090 = vpop.f32.mrf.mxu0
    %v1091 = vadd.f32 %v1022, %v1090
    %1092 = vdwg.mxu0
    %v1093 = vand.u32 %v788, 4294901760
    %1094 = vmatpush.msra.mxu0 %v1093
    %v1095 = vand.u32 %v787, 4294901760
    %1096 = vmatpush.msra.mxu0 %v1095
    %v1097 = vand.u32 %v786, 4294901760
    %1098 = vmatpush.msra.mxu0 %v1097
    %v1099 = vand.u32 %v785, 4294901760
    %1100 = vmatpush.msra.mxu0 %v1099
    %v1101 = vand.u32 %v784, 4294901760
    %1102 = vmatpush.msra.mxu0 %v1101
    %v1103 = vand.u32 %v783, 4294901760
    %1104 = vmatpush.msra.mxu0 %v1103
    %v1105 = vand.u32 %v782, 4294901760
    %1106 = vmatpush.msra.mxu0 %v1105
    %v1107 = vand.u32 %v781, 4294901760
    %1108 = vmatpush.msra.mxu0 %v1107
    %v1109 = vand.u32 %v780, 4294901760
    %1110 = vmatpush.msra.mxu0 %v1109
    %v1111 = vand.u32 %v779, 4294901760
    %1112 = vmatpush.msra.mxu0 %v1111
    %v1113 = vand.u32 %v778, 4294901760
    %1114 = vmatpush.msra.mxu0 %v1113
    %v1115 = vand.u32 %v777, 4294901760
    %1116 = vmatpush.msra.mxu0 %v1115
    %v1117 = vand.u32 %v776, 4294901760
    %1118 = vmatpush.msra.mxu0 %v1117
    %v1119 = vand.u32 %v775, 4294901760
    %1120 = vmatpush.msra.mxu0 %v1119
    %v1121 = vand.u32 %v774, 4294901760
    %1122 = vmatpush.msra.mxu0 %v1121
    %v1123 = vand.u32 %v773, 4294901760
    %1124 = vmatpush.msra.mxu0 %v1123
    %v1125 = vand.u32 %v767, 4294901760
    %1126 = vmatmul.f32.gmra.mxu0 %v1125
    %v1127 = vpop.f32.mrf.mxu0
    %v1128 = vadd.f32 %v1091, %v1127
    %1129 = vdwg.mxu0
    %v1130 = vadd.f32 %v772, %v1128
    %1131 = vst [vmem:[#allocation2] sm:$0xff] %v1130
    // Predicated region
    $region22: #{nnlm_forward.1} parent=1 // pred_check
      _
    $region23: #{nnlm_forward.1} parent=1 // pred_check_branch
      %1133 = sbr.rel (0) target = $region25
    $region24: #{nnlm_forward.1} parent=1 // pred_region
      %1135 = vsyncadd [#allocation3], 0
      %s1137 = sshll.u32 [#allocation2], 4
      %s1138 = int_to_ptr.vmem [resolvable:$true] %s1137
      %s1139 = sshll.u32 %s5, 4
      %s1140 = int_to_ptr.hbm [resolvable:$true] %s1139
      %1142 = dma.vmem_to_hbm [thread:$0]  %s1138, 128, %s1140, [#allocation3]
    $region25: #{nnlm_forward.1} parent=1 // pred_fallthru
      _
    // Predicated region
    $region26: #{nnlm_forward.1} parent=1 // pred_check
      _
    $region27: #{nnlm_forward.1} parent=1 // pred_check_branch
      %1144 = sbr.rel (0) target = $region29
    $region28: #{nnlm_forward.1} parent=1 // pred_region
      %1146 = dma.done [#allocation3], 128
    $region29: #{nnlm_forward.1} parent=1 // pred_fallthru
      _
    %1147 = vsyncpa [#allocation3], 1

</llo_original>
